<compile_context>
chip_gen: v7x
topology: tpu7x:2x2x1
jax: 0.10.0
libtpu: 0.0.40
codegen_flags: <defaults>
</compile_context>

<pallas_src>
import functools

import jax
import jax.numpy as jnp
from jax.experimental import pallas as pl
from jax.experimental.pallas import tpu as pltpu

EPS = 1e-5
C_IN = 3        # GuideNN input channels
C_HID = 16      # conv1 output channels
C_OUT = 1       # conv2 output channels
TP_CAP = 32768  # max pixels per tile (lane axis), multiple of 128
VMEM_LIMIT = 32 * 1024 * 1024  # >= default on all of v5e/v6e/v7x, safe headroom


def _round_up(x, m):
    return ((x + m - 1) // m) * m


def _choose_tile(hw, cap=TP_CAP):
    """Largest lane-tile (multiple of 128, <= cap) that minimizes ragged waste."""
    ntiles = -(-hw // cap)                    # cdiv
    return _round_up(-(-hw // ntiles), 128)


def _default_compute_dtype():
    """bf16 VPU math only on v6e/v7x; v5e and older have no bf16 VALU path."""
    try:
        kind = jax.devices()[0].device_kind.lower()
    except Exception:
        return jnp.float32
    if ("v6" in kind) or ("v7" in kind):
        return jnp.bfloat16
    return jnp.float32


def _conv1(x, w1, b1):
    """1x1 conv as VPU broadcast-FMAs.

    x:  (C_IN, TP)   pixels on lanes, channels on sublanes
    w1: (C_HID, C_IN)
    b1: (C_HID, 1)
    ->  (C_HID, TP)
    """
    acc = w1[:, 0:1] * x[0:1, :]
    for c in range(1, C_IN):
        acc = acc + w1[:, c:c + 1] * x[c:c + 1, :]
    return acc + b1


# --------------------------------------------------------------------------
# Pass 1: per-image partial sums of h = conv1(x) and h^2 (BN batch stats).
# --------------------------------------------------------------------------
def _stats_kernel(x_ref, w1_ref, b1_ref, sum_ref, sq_ref, *, tp, hw, num_tiles):
    t = pl.program_id(1)

    @pl.when(t == 0)
    def _():
        sum_ref[...] = jnp.zeros_like(sum_ref)
        sq_ref[...] = jnp.zeros_like(sq_ref)

    h = _conv1(x_ref[...], w1_ref[...], b1_ref[...])          # (C_HID, tp) f32

    if hw % tp == 0:
        sum_ref[...] += jnp.sum(h, axis=1, keepdims=True)
        sq_ref[...] += jnp.sum(h * h, axis=1, keepdims=True)
    else:
        # Only the last tile of each image is ragged (Pallas clamps the DMA;
        # the pad lanes hold unspecified data) -> mask it there, skip the
        # masking cost on every other tile.
        @pl.when(t < num_tiles - 1)
        def _():
            sum_ref[...] += jnp.sum(h, axis=1, keepdims=True)
            sq_ref[...] += jnp.sum(h * h, axis=1, keepdims=True)

        @pl.when(t == num_tiles - 1)
        def _():
            pix = (jax.lax.broadcasted_iota(jnp.int32, (1, tp), 1) + t * tp)
            hm = jnp.where(pix < hw, h, 0.0)
            sum_ref[...] += jnp.sum(hm, axis=1, keepdims=True)
            sq_ref[...] += jnp.sum(hm * hm, axis=1, keepdims=True)


# --------------------------------------------------------------------------
# Pass 2: folded conv1+BN -> ReLU -> conv2 -> tanh.
# --------------------------------------------------------------------------
def _apply_kernel(x_ref, w1p_ref, b1p_ref, w2_ref, b2_ref, o_ref, *, compute_dtype):
    xv = x_ref[...].astype(compute_dtype)                     # (C_IN, tp)
    h = _conv1(xv, w1p_ref[...], b1p_ref[...])                # BN already folded in
    h = jnp.maximum(h, 0.0)                                   # ReLU
    # conv2: (1, C_HID) @ (C_HID, tp) as broadcast-multiply + sublane reduce.
    y = jnp.sum(w2_ref[...] * h, axis=0, keepdims=True)
    y = y.astype(jnp.float32) + b2_ref[...]
    o_ref[...] = jnp.tanh(y).astype(o_ref.dtype)              # (1, tp), lane-dense


def guidenn_forward(x_nchw, params, *, compute_dtype=jnp.float32, tile_cap=TP_CAP):
    """x_nchw: (N, 3, H, W) float32 -> (N, 1, H, W) float32."""
    n, c, h, w = x_nchw.shape
    assert c == C_IN
    hw = h * w
    tp = _choose_tile(hw, tile_cap)
    num_tiles = -(-hw // tp)

    # NCHW -> (N, C, H*W) is a free reshape (contiguous); pixels go to lanes.
    # No jnp.pad: ragged last tiles are handled in-kernel.
    x = x_nchw.reshape(n, C_IN, hw).astype(jnp.float32)

    w1 = params["w1"].astype(jnp.float32)                          # (C_HID, C_IN)
    b1 = params["b1"].reshape(C_HID, 1).astype(jnp.float32)
    gamma = params["gamma"].reshape(C_HID, 1).astype(jnp.float32)
    beta = params["beta"].reshape(C_HID, 1).astype(jnp.float32)
    w2 = params["w2"].reshape(C_OUT, C_HID).T.astype(jnp.float32)  # (C_HID, 1)
    b2 = params["b2"].reshape(1, 1).astype(jnp.float32)

    x_spec = pl.BlockSpec((None, C_IN, tp), lambda i, t: (i, 0, t))
    w1_spec = pl.BlockSpec((C_HID, C_IN), lambda i, t: (0, 0))
    col_spec = pl.BlockSpec((C_HID, 1), lambda i, t: (0, 0))
    b2_spec = pl.BlockSpec((1, 1), lambda i, t: (0, 0))
    part_spec = pl.BlockSpec((None, C_HID, 1), lambda i, t: (i, 0, 0))

    # ---- pass 1: BN batch statistics (per-image partials, image axis parallel
    #      so it megacore-shards on v7x; reduced over images in XLA below) ----
    part_sum, part_sq = pl.pallas_call(
        functools.partial(_stats_kernel, tp=tp, hw=hw, num_tiles=num_tiles),
        out_shape=(jax.ShapeDtypeStruct((n, C_HID, 1), jnp.float32),
                   jax.ShapeDtypeStruct((n, C_HID, 1), jnp.float32)),
        grid=(n, num_tiles),
        in_specs=[x_spec, w1_spec, col_spec],
        out_specs=(part_spec, part_spec),
        compiler_params=pltpu.CompilerParams(
            dimension_semantics=("parallel", "arbitrary"),
            vmem_limit_bytes=VMEM_LIMIT),
    )(x, w1, b1)

    # Fold BN into conv1 (tiny XLA math between the two passes).
    # TODO(synk): for huge N*H*W with large channel means, switch to per-tile
    # centered partial sums to avoid E[h^2]-E[h]^2 cancellation.
    h_sum = jnp.sum(part_sum, axis=0)                 # (C_HID, 1)
    h_sq = jnp.sum(part_sq, axis=0)                   # (C_HID, 1)
    p_total = jnp.float32(n * hw)
    mean = h_sum / p_total
    var = h_sq / p_total - mean * mean                # biased variance (training BN)
    scale = gamma * jax.lax.rsqrt(var + EPS)
    shift = beta - mean * scale
    w1p = (w1 * scale).astype(compute_dtype)          # (C_HID, C_IN), BN folded
    b1p = (b1 * scale + shift).astype(compute_dtype)  # (C_HID, 1)
    w2c = w2.astype(compute_dtype)

    # ---- pass 2: folded conv1 + ReLU + conv2 + tanh (fully parallel grid) ----
    out = pl.pallas_call(
        functools.partial(_apply_kernel, compute_dtype=compute_dtype),
        out_shape=jax.ShapeDtypeStruct((n, C_OUT, hw), jnp.float32),
        grid=(n, num_tiles),
        in_specs=[x_spec, w1_spec, col_spec, col_spec, b2_spec],
        out_specs=pl.BlockSpec((None, C_OUT, tp), lambda i, t: (i, 0, t)),
        compiler_params=pltpu.CompilerParams(
            dimension_semantics=("parallel", "parallel"),
            vmem_limit_bytes=VMEM_LIMIT),
    )(x, w1p, b1p, w2c, b2)

    return out.reshape(n, C_OUT, h, w)


def init_params(key):
    k1, k2, k3, k4, k5, k6 = jax.random.split(key, 6)
    # conv weights (torch shape (out, in, 1, 1) squeezed to (out, in))
    w1 = jax.random.normal(k1, (C_HID, C_IN), jnp.float32) * (1.0 / jnp.sqrt(C_IN))
    b1 = jax.random.normal(k2, (C_HID,), jnp.float32) * 0.1
    w2 = jax.random.normal(k3, (C_OUT, C_HID), jnp.float32) * (1.0 / jnp.sqrt(C_HID))
    b2 = jax.random.normal(k4, (C_OUT,), jnp.float32) * 0.1
    # BN affine params (perturbed so the affine path is exercised)
    gamma = 1.0 + 0.1 * jax.random.normal(k5, (C_HID,), jnp.float32)
    beta = 0.1 * jax.random.normal(k6, (C_HID,), jnp.float32)
    return dict(w1=w1, b1=b1, w2=w2, b2=b2, gamma=gamma, beta=beta)


def reference_forward(x_nchw, params):
    """Pure-JAX reference with identical semantics (for self-check)."""
    n, c, h, w = x_nchw.shape
    x = jnp.transpose(x_nchw, (0, 2, 3, 1)).reshape(-1, C_IN)
    hdn = x @ params["w1"].T + params["b1"]
    mean = jnp.mean(hdn, axis=0, keepdims=True)
    var = jnp.mean((hdn - mean) ** 2, axis=0, keepdims=True)
    hdn = (hdn - mean) * jax.lax.rsqrt(var + EPS) * params["gamma"] + params["beta"]
    hdn = jnp.maximum(hdn, 0.0)
    y = jnp.tanh(hdn @ params["w2"].T + params["b2"])
    return jnp.transpose(y.reshape(n, h, w, C_OUT), (0, 3, 1, 2))


if __name__ == "__main__":
    key = jax.random.PRNGKey(0)
    kx, kp = jax.random.split(key)
    x = jax.random.normal(kx, (2, 3, 16, 16), jnp.float32)  # NCHW, like PyTorch
    params = init_params(kp)

    compute_dtype = _default_compute_dtype()
    # bf16 intermediates (v6e/v7x) trade a little precision for ~2x VALU
    # throughput; widen the tolerance accordingly (flagged in review).
    tol = 1e-5 if compute_dtype == jnp.float32 else 5e-2

    fwd = jax.jit(functools.partial(guidenn_forward, compute_dtype=compute_dtype))
    out = jax.block_until_ready(fwd(x, params))
    ref = jax.block_until_ready(reference_forward(x, params))

    assert out.shape == (2, 1, 16, 16), out.shape
    err = float(jnp.max(jnp.abs(out - ref)))
    assert jnp.allclose(out, ref, atol=tol, rtol=tol), err

    # Also exercise the multi-tile path (accumulation across the tile axis)
    # at a small shape by shrinking the tile cap.
    fwd_mt = jax.jit(functools.partial(
        guidenn_forward, compute_dtype=compute_dtype, tile_cap=128))
    out_mt = jax.block_until_ready(fwd_mt(x, params))
    err_mt = float(jnp.max(jnp.abs(out_mt - ref)))
    assert jnp.allclose(out_mt, ref, atol=tol, rtol=tol), err_mt

    print("KERNEL_OK")
</pallas_src>

<mosaic_0001>
module attributes {stable_mosaic.version = 11 : i64} {
  func.func @_stats_kernel(%arg0: i32, %arg1: i32, %arg2: memref<1x3x256xf32, #tpu.memory_space<vmem>>, %arg3: memref<16x3xf32, #tpu.memory_space<vmem>>, %arg4: memref<16x1xf32, #tpu.memory_space<vmem>>, %arg5: memref<1x16x1xf32, #tpu.memory_space<vmem>>, %arg6: memref<1x16x1xf32, #tpu.memory_space<vmem>>) attributes {dimension_semantics = [#tpu.dimension_semantics<parallel>, #tpu.dimension_semantics<arbitrary>], iteration_bounds = array<i64: 2, 1>, scalar_prefetch = 0 : i64, scratch_operands = 0 : i64, tpu.core_type = #tpu.core_type<tc>, window_params = [{transform_indices = @transform_0, window_bounds = array<i64: 1, 3, 256>}, {pipeline_mode = #tpu.pipeline_mode<synchronous>, transform_indices = @transform_1, window_bounds = array<i64: 16, 3>}, {pipeline_mode = #tpu.pipeline_mode<synchronous>, transform_indices = @transform_2, window_bounds = array<i64: 16, 1>}, {transform_indices = @transform_3, window_bounds = array<i64: 1, 16, 1>}, {transform_indices = @transform_4, window_bounds = array<i64: 1, 16, 1>}]} {
    %c0_i32 = arith.constant 0 : i32
    %0 = arith.cmpi eq, %arg1, %c0_i32 : i32
    %1 = arith.extui %0 : i1 to i32
    %c0_i32_0 = arith.constant 0 : i32
    %2 = arith.cmpi ne, %1, %c0_i32_0 : i32
    scf.if %2 {
      %cst_20 = arith.constant 0.000000e+00 : f32
      %43 = vector.broadcast %cst_20 : f32 to vector<16x1xf32>
      %c0_21 = arith.constant 0 : index
      %c0_22 = arith.constant 0 : index
      %c0_23 = arith.constant 0 : index
      %44 = vector.load %arg5[%c0_21, %c0_22, %c0_23] : memref<1x16x1xf32, #tpu.memory_space<vmem>>, vector<1x16x1xf32>
      %45 = vector.shape_cast %44 : vector<1x16x1xf32> to vector<16x1xf32>
      %46 = vector.shape_cast %43 : vector<16x1xf32> to vector<1x16x1xf32>
      tpu.vector_store %arg5[%c0_21, %c0_22, %c0_23], %46 {strides = array<i32>} : memref<1x16x1xf32, #tpu.memory_space<vmem>>, vector<1x16x1xf32>,
      %cst_24 = arith.constant 0.000000e+00 : f32
      %47 = vector.broadcast %cst_24 : f32 to vector<16x1xf32>
      %c0_25 = arith.constant 0 : index
      %c0_26 = arith.constant 0 : index
      %c0_27 = arith.constant 0 : index
      %48 = vector.load %arg6[%c0_25, %c0_26, %c0_27] : memref<1x16x1xf32, #tpu.memory_space<vmem>>, vector<1x16x1xf32>
      %49 = vector.shape_cast %48 : vector<1x16x1xf32> to vector<16x1xf32>
      %50 = vector.shape_cast %47 : vector<16x1xf32> to vector<1x16x1xf32>
      tpu.vector_store %arg6[%c0_25, %c0_26, %c0_27], %50 {strides = array<i32>} : memref<1x16x1xf32, #tpu.memory_space<vmem>>, vector<1x16x1xf32>,
    } else {
    }
    %c0 = arith.constant 0 : index
    %c0_1 = arith.constant 0 : index
    %c0_2 = arith.constant 0 : index
    %3 = vector.load %arg2[%c0, %c0_1, %c0_2] : memref<1x3x256xf32, #tpu.memory_space<vmem>>, vector<1x3x256xf32>
    %4 = vector.shape_cast %3 : vector<1x3x256xf32> to vector<3x256xf32>
    %c0_3 = arith.constant 0 : index
    %c0_4 = arith.constant 0 : index
    %5 = vector.load %arg3[%c0_3, %c0_4] : memref<16x3xf32, #tpu.memory_space<vmem>>, vector<16x3xf32>
    %c0_5 = arith.constant 0 : index
    %c0_6 = arith.constant 0 : index
    %6 = vector.load %arg4[%c0_5, %c0_6] : memref<16x1xf32, #tpu.memory_space<vmem>>, vector<16x1xf32>
    %7 = vector.extract_strided_slice %5 {offsets = [0, 0], sizes = [16, 1], strides = [1, 1]} : vector<16x3xf32> to vector<16x1xf32>
    %8 = vector.extract_strided_slice %4 {offsets = [0, 0], sizes = [1, 256], strides = [1, 1]} : vector<3x256xf32> to vector<1x256xf32>
    %9 = vector.broadcast %7 : vector<16x1xf32> to vector<16x256xf32>
    %10 = vector.broadcast %8 : vector<1x256xf32> to vector<16x256xf32>
    %11 = arith.mulf %9, %10 : vector<16x256xf32>
    %12 = vector.extract_strided_slice %5 {offsets = [0, 1], sizes = [16, 1], strides = [1, 1]} : vector<16x3xf32> to vector<16x1xf32>
    %13 = vector.extract_strided_slice %4 {offsets = [1, 0], sizes = [1, 256], strides = [1, 1]} : vector<3x256xf32> to vector<1x256xf32>
    %14 = vector.broadcast %12 : vector<16x1xf32> to vector<16x256xf32>
    %15 = vector.broadcast %13 : vector<1x256xf32> to vector<16x256xf32>
    %16 = arith.mulf %14, %15 : vector<16x256xf32>
    %17 = arith.addf %11, %16 : vector<16x256xf32>
    %18 = vector.extract_strided_slice %5 {offsets = [0, 2], sizes = [16, 1], strides = [1, 1]} : vector<16x3xf32> to vector<16x1xf32>
    %19 = vector.extract_strided_slice %4 {offsets = [2, 0], sizes = [1, 256], strides = [1, 1]} : vector<3x256xf32> to vector<1x256xf32>
    %20 = vector.broadcast %18 : vector<16x1xf32> to vector<16x256xf32>
    %21 = vector.broadcast %19 : vector<1x256xf32> to vector<16x256xf32>
    %22 = arith.mulf %20, %21 : vector<16x256xf32>
    %23 = arith.addf %17, %22 : vector<16x256xf32>
    %24 = vector.broadcast %6 : vector<16x1xf32> to vector<16x256xf32>
    %25 = arith.addf %23, %24 : vector<16x256xf32>
    %c0_7 = arith.constant 0 : index
    %c0_8 = arith.constant 0 : index
    %c0_9 = arith.constant 0 : index
    %26 = vector.load %arg5[%c0_7, %c0_8, %c0_9] : memref<1x16x1xf32, #tpu.memory_space<vmem>>, vector<1x16x1xf32>
    %27 = vector.shape_cast %26 : vector<1x16x1xf32> to vector<16x1xf32>
    %cst = arith.constant dense<0.000000e+00> : vector<16xf32>
    %28 = vector.multi_reduction <add>, %25, %cst [1] : vector<16x256xf32> to vector<16xf32>
    %29 = vector.shape_cast %28 : vector<16xf32> to vector<16x1xf32>
    %30 = arith.addf %27, %29 : vector<16x1xf32>
    %c0_10 = arith.constant 0 : index
    %c0_11 = arith.constant 0 : index
    %c0_12 = arith.constant 0 : index
    %31 = vector.load %arg5[%c0_10, %c0_11, %c0_12] : memref<1x16x1xf32, #tpu.memory_space<vmem>>, vector<1x16x1xf32>
    %32 = vector.shape_cast %31 : vector<1x16x1xf32> to vector<16x1xf32>
    %33 = vector.shape_cast %30 : vector<16x1xf32> to vector<1x16x1xf32>
    tpu.vector_store %arg5[%c0_10, %c0_11, %c0_12], %33 {strides = array<i32>} : memref<1x16x1xf32, #tpu.memory_space<vmem>>, vector<1x16x1xf32>,
    %c0_13 = arith.constant 0 : index
    %c0_14 = arith.constant 0 : index
    %c0_15 = arith.constant 0 : index
    %34 = vector.load %arg6[%c0_13, %c0_14, %c0_15] : memref<1x16x1xf32, #tpu.memory_space<vmem>>, vector<1x16x1xf32>
    %35 = vector.shape_cast %34 : vector<1x16x1xf32> to vector<16x1xf32>
    %36 = arith.mulf %25, %25 : vector<16x256xf32>
    %cst_16 = arith.constant dense<0.000000e+00> : vector<16xf32>
    %37 = vector.multi_reduction <add>, %36, %cst_16 [1] : vector<16x256xf32> to vector<16xf32>
    %38 = vector.shape_cast %37 : vector<16xf32> to vector<16x1xf32>
    %39 = arith.addf %35, %38 : vector<16x1xf32>
    %c0_17 = arith.constant 0 : index
    %c0_18 = arith.constant 0 : index
    %c0_19 = arith.constant 0 : index
    %40 = vector.load %arg6[%c0_17, %c0_18, %c0_19] : memref<1x16x1xf32, #tpu.memory_space<vmem>>, vector<1x16x1xf32>
    %41 = vector.shape_cast %40 : vector<1x16x1xf32> to vector<16x1xf32>
    %42 = vector.shape_cast %39 : vector<16x1xf32> to vector<1x16x1xf32>
    tpu.vector_store %arg6[%c0_17, %c0_18, %c0_19], %42 {strides = array<i32>} : memref<1x16x1xf32, #tpu.memory_space<vmem>>, vector<1x16x1xf32>,
    return
  }
  func.func @transform_0(%arg0: i32, %arg1: i32) -> (i32, i32, i32) {
    %c0_i32 = arith.constant 0 : i32
    %c0_i32_0 = arith.constant 0 : i32
    return %arg0, %c0_i32, %arg1 : i32, i32, i32
  }
  func.func @transform_1(%arg0: i32, %arg1: i32) -> (i32, i32) {
    %c0_i32 = arith.constant 0 : i32
    %c0_i32_0 = arith.constant 0 : i32
    %c0_i32_1 = arith.constant 0 : i32
    return %c0_i32, %c0_i32_0 : i32, i32
  }
  func.func @transform_2(%arg0: i32, %arg1: i32) -> (i32, i32) {
    %c0_i32 = arith.constant 0 : i32
    %c0_i32_0 = arith.constant 0 : i32
    %c0_i32_1 = arith.constant 0 : i32
    return %c0_i32, %c0_i32_0 : i32, i32
  }
  func.func @transform_3(%arg0: i32, %arg1: i32) -> (i32, i32, i32) {
    %c0_i32 = arith.constant 0 : i32
    %c0_i32_0 = arith.constant 0 : i32
    %c0_i32_1 = arith.constant 0 : i32
    return %arg0, %c0_i32, %c0_i32_0 : i32, i32, i32
  }
  func.func @transform_4(%arg0: i32, %arg1: i32) -> (i32, i32, i32) {
    %c0_i32 = arith.constant 0 : i32
    %c0_i32_0 = arith.constant 0 : i32
    %c0_i32_1 = arith.constant 0 : i32
    return %arg0, %c0_i32, %c0_i32_0 : i32, i32, i32
  }
}

module attributes {stable_mosaic.version = 11 : i64} {
  func.func @_apply_kernel(%arg0: i32, %arg1: i32, %arg2: memref<1x3x256xf32, #tpu.memory_space<vmem>>, %arg3: memref<16x3xf32, #tpu.memory_space<vmem>>, %arg4: memref<16x1xf32, #tpu.memory_space<vmem>>, %arg5: memref<16x1xf32, #tpu.memory_space<vmem>>, %arg6: memref<1x1xf32, #tpu.memory_space<vmem>>, %arg7: memref<1x1x256xf32, #tpu.memory_space<vmem>>) attributes {dimension_semantics = [#tpu.dimension_semantics<parallel>, #tpu.dimension_semantics<parallel>], iteration_bounds = array<i64: 2, 1>, scalar_prefetch = 0 : i64, scratch_operands = 0 : i64, tpu.core_type = #tpu.core_type<tc>, window_params = [{transform_indices = @transform_0, window_bounds = array<i64: 1, 3, 256>}, {pipeline_mode = #tpu.pipeline_mode<synchronous>, transform_indices = @transform_1, window_bounds = array<i64: 16, 3>}, {pipeline_mode = #tpu.pipeline_mode<synchronous>, transform_indices = @transform_2, window_bounds = array<i64: 16, 1>}, {pipeline_mode = #tpu.pipeline_mode<synchronous>, transform_indices = @transform_3, window_bounds = array<i64: 16, 1>}, {pipeline_mode = #tpu.pipeline_mode<synchronous>, transform_indices = @transform_4, window_bounds = array<i64: 1, 1>}, {transform_indices = @transform_5, window_bounds = array<i64: 1, 1, 256>}]} {
    %c0 = arith.constant 0 : index
    %c0_0 = arith.constant 0 : index
    %c0_1 = arith.constant 0 : index
    %0 = vector.load %arg2[%c0, %c0_0, %c0_1] : memref<1x3x256xf32, #tpu.memory_space<vmem>>, vector<1x3x256xf32>
    %1 = vector.shape_cast %0 : vector<1x3x256xf32> to vector<3x256xf32>
    %c0_2 = arith.constant 0 : index
    %c0_3 = arith.constant 0 : index
    %2 = vector.load %arg3[%c0_2, %c0_3] : memref<16x3xf32, #tpu.memory_space<vmem>>, vector<16x3xf32>
    %c0_4 = arith.constant 0 : index
    %c0_5 = arith.constant 0 : index
    %3 = vector.load %arg4[%c0_4, %c0_5] : memref<16x1xf32, #tpu.memory_space<vmem>>, vector<16x1xf32>
    %4 = vector.extract_strided_slice %2 {offsets = [0, 0], sizes = [16, 1], strides = [1, 1]} : vector<16x3xf32> to vector<16x1xf32>
    %5 = vector.extract_strided_slice %1 {offsets = [0, 0], sizes = [1, 256], strides = [1, 1]} : vector<3x256xf32> to vector<1x256xf32>
    %6 = vector.broadcast %4 : vector<16x1xf32> to vector<16x256xf32>
    %7 = vector.broadcast %5 : vector<1x256xf32> to vector<16x256xf32>
    %8 = arith.mulf %6, %7 : vector<16x256xf32>
    %9 = vector.extract_strided_slice %2 {offsets = [0, 1], sizes = [16, 1], strides = [1, 1]} : vector<16x3xf32> to vector<16x1xf32>
    %10 = vector.extract_strided_slice %1 {offsets = [1, 0], sizes = [1, 256], strides = [1, 1]} : vector<3x256xf32> to vector<1x256xf32>
    %11 = vector.broadcast %9 : vector<16x1xf32> to vector<16x256xf32>
    %12 = vector.broadcast %10 : vector<1x256xf32> to vector<16x256xf32>
    %13 = arith.mulf %11, %12 : vector<16x256xf32>
    %14 = arith.addf %8, %13 : vector<16x256xf32>
    %15 = vector.extract_strided_slice %2 {offsets = [0, 2], sizes = [16, 1], strides = [1, 1]} : vector<16x3xf32> to vector<16x1xf32>
    %16 = vector.extract_strided_slice %1 {offsets = [2, 0], sizes = [1, 256], strides = [1, 1]} : vector<3x256xf32> to vector<1x256xf32>
    %17 = vector.broadcast %15 : vector<16x1xf32> to vector<16x256xf32>
    %18 = vector.broadcast %16 : vector<1x256xf32> to vector<16x256xf32>
    %19 = arith.mulf %17, %18 : vector<16x256xf32>
    %20 = arith.addf %14, %19 : vector<16x256xf32>
    %21 = vector.broadcast %3 : vector<16x1xf32> to vector<16x256xf32>
    %22 = arith.addf %20, %21 : vector<16x256xf32>
    %cst = arith.constant 0.000000e+00 : f32
    %23 = vector.broadcast %cst : f32 to vector<16x256xf32>
    %24 = arith.maximumf %22, %23 : vector<16x256xf32>
    %c0_6 = arith.constant 0 : index
    %c0_7 = arith.constant 0 : index
    %25 = vector.load %arg5[%c0_6, %c0_7] : memref<16x1xf32, #tpu.memory_space<vmem>>, vector<16x1xf32>
    %26 = vector.broadcast %25 : vector<16x1xf32> to vector<16x256xf32>
    %27 = arith.mulf %26, %24 : vector<16x256xf32>
    %cst_8 = arith.constant dense<0.000000e+00> : vector<256xf32>
    %28 = vector.multi_reduction <add>, %27, %cst_8 [0] : vector<16x256xf32> to vector<256xf32>
    %29 = vector.shape_cast %28 : vector<256xf32> to vector<1x256xf32>
    %c0_9 = arith.constant 0 : index
    %c0_10 = arith.constant 0 : index
    %30 = vector.load %arg6[%c0_9, %c0_10] : memref<1x1xf32, #tpu.memory_space<vmem>>, vector<1x1xf32>
    %31 = vector.broadcast %30 : vector<1x1xf32> to vector<1x256xf32>
    %32 = arith.addf %29, %31 : vector<1x256xf32>
    %33 = math.tanh %32 : vector<1x256xf32>
    %c0_11 = arith.constant 0 : index
    %c0_12 = arith.constant 0 : index
    %c0_13 = arith.constant 0 : index
    %34 = vector.load %arg7[%c0_11, %c0_12, %c0_13] : memref<1x1x256xf32, #tpu.memory_space<vmem>>, vector<1x1x256xf32>
    %35 = vector.shape_cast %34 : vector<1x1x256xf32> to vector<1x256xf32>
    %36 = vector.shape_cast %33 : vector<1x256xf32> to vector<1x1x256xf32>
    tpu.vector_store %arg7[%c0_11, %c0_12, %c0_13], %36 {strides = array<i32>} : memref<1x1x256xf32, #tpu.memory_space<vmem>>, vector<1x1x256xf32>,
    return
  }
  func.func @transform_0(%arg0: i32, %arg1: i32) -> (i32, i32, i32) {
    %c0_i32 = arith.constant 0 : i32
    %c0_i32_0 = arith.constant 0 : i32
    return %arg0, %c0_i32, %arg1 : i32, i32, i32
  }
  func.func @transform_1(%arg0: i32, %arg1: i32) -> (i32, i32) {
    %c0_i32 = arith.constant 0 : i32
    %c0_i32_0 = arith.constant 0 : i32
    %c0_i32_1 = arith.constant 0 : i32
    return %c0_i32, %c0_i32_0 : i32, i32
  }
  func.func @transform_2(%arg0: i32, %arg1: i32) -> (i32, i32) {
    %c0_i32 = arith.constant 0 : i32
    %c0_i32_0 = arith.constant 0 : i32
    %c0_i32_1 = arith.constant 0 : i32
    return %c0_i32, %c0_i32_0 : i32, i32
  }
  func.func @transform_3(%arg0: i32, %arg1: i32) -> (i32, i32) {
    %c0_i32 = arith.constant 0 : i32
    %c0_i32_0 = arith.constant 0 : i32
    %c0_i32_1 = arith.constant 0 : i32
    return %c0_i32, %c0_i32_0 : i32, i32
  }
  func.func @transform_4(%arg0: i32, %arg1: i32) -> (i32, i32) {
    %c0_i32 = arith.constant 0 : i32
    %c0_i32_0 = arith.constant 0 : i32
    %c0_i32_1 = arith.constant 0 : i32
    return %c0_i32, %c0_i32_0 : i32, i32
  }
  func.func @transform_5(%arg0: i32, %arg1: i32) -> (i32, i32, i32) {
    %c0_i32 = arith.constant 0 : i32
    %c0_i32_0 = arith.constant 0 : i32
    return %arg0, %c0_i32, %arg1 : i32, i32, i32
  }
}

</mosaic_0001>

<llo_original>
// kernel: guidenn_forward.2
$region0: #{guidenn_forward.2}
  #allocation0 [shape = 'u32[]', space=smem, size = 0x4, offset = 0x4, fixed_abs, tag = 'smem constant byte address 0x4 - core index']
  #allocation1 [shape = 'u32[144,128]{1,0:T(1,128)}', space=vmem, size = 0x12000, scoped, tag = 'internal scratch']
  %s0 = inlined_call_operand.vmem [shape: f32[2,3,256], index: 0, kind: input, shape index: {}]
  %s1 = inlined_call_operand.vmem [shape: f32[16,3], index: 1, kind: input, shape index: {}]
  %s2 = inlined_call_operand.vmem [shape: f32[16,1], index: 2, kind: input, shape index: {}]
  %s3 = inlined_call_operand.vmem [shape: f32[2,16,1], index: 3, kind: output, shape index: {0}]
  %s4 = inlined_call_operand.vmem [shape: f32[2,16,1], index: 4, kind: output, shape index: {1}]
  %5 = xla_tuple %s3, %s4
  %s6 = sld [smem:[#allocation0]]
  $region57: #{guidenn_forward.2} parent=0
    _
  %s8 = ssub.s32 1, %s6
  %s9 = scalar_select 0, %s8, %s6
  loop: start=0, step=1, limit=4
  $region2: #{guidenn_forward.2} parent=0 // loop_pre_header
    _
  $region3: #{guidenn_forward.2} parent=0 // loop_header
    %s11 = sphi 0, %s15
    %p12 = scmp.ge.s32.totalorder %s11, 4
    %s18 = sphi 0, %s30
    %s19 = sphi 0, %s26
    %s20 = sphi 0, %s18
    %s21 = sphi 0, %s19
    %s22 = sphi 0, %s20
    %s23 = sphi 0, %s21
    %s35 = sphi 0, %s37
    %s38 = sphi 0, %s35
    %s39 = sphi 0, %s38
    %s55 = sphi 0, %s39
    %s59 = sphi 0, %s59
    %s61 = sphi 0, %s59
    %s62 = sphi 0, %s61
    %s76 = sphi 0, %s62
    %s80 = sphi 0, %s80
    %s82 = sphi 0, %s80
    %s83 = sphi 0, %s82
    %s97 = sphi 0, %s83
    %s103 = sphi 0, %s105
    %s106 = sphi 0, %s103
    %s107 = sphi 0, %s106
    %s123 = sphi 0, %s107
    %s129 = sphi 0, %s131
    %s132 = sphi 0, %s129
    %s133 = sphi 0, %s132
    %s149 = sphi 0, %s133
  $region4: #{guidenn_forward.2} parent=0 // loop_header_branch
    %14 = sbr.rel (%p12) target = $region8
  $region5: #{guidenn_forward.2} parent=0 // loop_body
    %s16 = ssub.s32 %s11, 1
    %s17 = ssub.s32 %s11, 2
    %s24 = sadd.s32 1, %s19
    %p25 = scmp.ge.s32.totalorder %s24, 1
    %s26 = scalar_select %p25, 0, %s24
    %s27 = sadd.s32 1, %s18
    %s28 = scalar_select %p25, %s27, %s18
    %p29 = scmp.ge.s32.totalorder %s28, 2
    %s30 = scalar_select %p29, 0, %s28
    %s31 = ssub.s32 %s18, %s30
    %s32 = ssub.s32 %s19, %s26
    %s33 = sor.u32 %s31, %s32
    %p34 = scmp.eq.s32.totalorder %s33, 0
    %s36 = sadd.s32 %s35, 1
    %s37 = scalar_select %p34, %s35, %s36
    %p40 = pneg %p34
    %p41 = scmp.eq.s32.totalorder %s11, 1
    %p42 = por %p40, %p41
    %p43 = scmp.ne.s32.totalorder %s35, %s38
    %p44 = scmp.eq.s32.totalorder %s11, 0
    %p45 = por %p43, %p44
    %p46 = scmp.ne.s32.totalorder %s35, %s38
    %p47 = scmp.eq.s32.totalorder %s16, 1
    %p48 = por %p46, %p47
    %p49 = scmp.ne.s32.totalorder %s38, %s39
    %p50 = scmp.eq.s32.totalorder %s16, 0
    %p51 = por %p49, %p50
    %p52 = scmp.ne.s32.totalorder %s38, %s39
    %p53 = scmp.eq.s32.totalorder %s17, 1
    %p54 = por %p52, %p53
    %p56 = scmp.ne.s32.totalorder %s39, %s55
    %p57 = scmp.eq.s32.totalorder %s17, 0
    %p58 = por %p56, %p57
    %s60 = sadd.s32 %s59, 1
    %p63 = scmp.eq.s32.totalorder %s11, 1
    %p64 = scmp.ne.s32.totalorder %s59, %s61
    %p65 = scmp.eq.s32.totalorder %s11, 0
    %p66 = por %p64, %p65
    %p67 = scmp.ne.s32.totalorder %s59, %s61
    %p68 = scmp.eq.s32.totalorder %s16, 1
    %p69 = por %p67, %p68
    %p70 = scmp.ne.s32.totalorder %s61, %s62
    %p71 = scmp.eq.s32.totalorder %s16, 0
    %p72 = por %p70, %p71
    %p73 = scmp.ne.s32.totalorder %s61, %s62
    %p74 = scmp.eq.s32.totalorder %s17, 1
    %p75 = por %p73, %p74
    %p77 = scmp.ne.s32.totalorder %s62, %s76
    %p78 = scmp.eq.s32.totalorder %s17, 0
    %p79 = por %p77, %p78
    %s81 = sadd.s32 %s80, 1
    %p84 = scmp.eq.s32.totalorder %s11, 1
    %p85 = scmp.ne.s32.totalorder %s80, %s82
    %p86 = scmp.eq.s32.totalorder %s11, 0
    %p87 = por %p85, %p86
    %p88 = scmp.ne.s32.totalorder %s80, %s82
    %p89 = scmp.eq.s32.totalorder %s16, 1
    %p90 = por %p88, %p89
    %p91 = scmp.ne.s32.totalorder %s82, %s83
    %p92 = scmp.eq.s32.totalorder %s16, 0
    %p93 = por %p91, %p92
    %p94 = scmp.ne.s32.totalorder %s82, %s83
    %p95 = scmp.eq.s32.totalorder %s17, 1
    %p96 = por %p94, %p95
    %p98 = scmp.ne.s32.totalorder %s83, %s97
    %p99 = scmp.eq.s32.totalorder %s17, 0
    %p100 = por %p98, %p99
    %s101 = ssub.s32 %s18, %s30
    %p102 = scmp.eq.s32.totalorder %s101, 0
    %s104 = sadd.s32 %s103, 1
    %s105 = scalar_select %p102, %s103, %s104
    %p108 = pneg %p102
    %p109 = scmp.eq.s32.totalorder %s11, 1
    %p110 = por %p108, %p109
    %p111 = scmp.ne.s32.totalorder %s103, %s106
    %p112 = scmp.eq.s32.totalorder %s11, 0
    %p113 = por %p111, %p112
    %p114 = scmp.ne.s32.totalorder %s103, %s106
    %p115 = scmp.eq.s32.totalorder %s16, 1
    %p116 = por %p114, %p115
    %p117 = scmp.ne.s32.totalorder %s106, %s107
    %p118 = scmp.eq.s32.totalorder %s16, 0
    %p119 = por %p117, %p118
    %p120 = scmp.ne.s32.totalorder %s106, %s107
    %p121 = scmp.eq.s32.totalorder %s17, 1
    %p122 = por %p120, %p121
    %p124 = scmp.ne.s32.totalorder %s107, %s123
    %p125 = scmp.eq.s32.totalorder %s17, 0
    %p126 = por %p124, %p125
    %s127 = ssub.s32 %s18, %s30
    %p128 = scmp.eq.s32.totalorder %s127, 0
    %s130 = sadd.s32 %s129, 1
    %s131 = scalar_select %p128, %s129, %s130
    %p134 = pneg %p128
    %p135 = scmp.eq.s32.totalorder %s11, 1
    %p136 = por %p134, %p135
    %p137 = scmp.ne.s32.totalorder %s129, %s132
    %p138 = scmp.eq.s32.totalorder %s11, 0
    %p139 = por %p137, %p138
    %p140 = scmp.ne.s32.totalorder %s129, %s132
    %p141 = scmp.eq.s32.totalorder %s16, 1
    %p142 = por %p140, %p141
    %p143 = scmp.ne.s32.totalorder %s132, %s133
    %p144 = scmp.eq.s32.totalorder %s16, 0
    %p145 = por %p143, %p144
    %p146 = scmp.ne.s32.totalorder %s132, %s133
    %p147 = scmp.eq.s32.totalorder %s17, 1
    %p148 = por %p146, %p147
    %p150 = scmp.ne.s32.totalorder %s133, %s149
    %p151 = scmp.eq.s32.totalorder %s17, 0
    %p152 = por %p150, %p151
    %p153 = scmp.le.s32.totalorder 1, %s11
    %p154 = scmp.lt.s32.totalorder %s11, 3
    %p155 = pnand %p153, %p154
    %p156 = pneg %p155
    // Predicated region
    $region9: #{guidenn_forward.2} parent=5 // pred_check
      _
    $region10: #{guidenn_forward.2} parent=5 // pred_check_branch
      %158 = sbr.rel (%p155) target = $region12
    $region11: #{guidenn_forward.2} parent=5 // pred_region
      %s159 = ssub.s32 %s11, 1
      // Predicated region
      $region13: #{guidenn_forward.2} parent=11 // pred_check
        %p160 = pneg %p72
      $region14: #{guidenn_forward.2} parent=11 // pred_check_branch
        %162 = sbr.rel (%p160) target = $region16
      $region15: #{guidenn_forward.2} parent=11 // pred_region
        _
      $region16: #{guidenn_forward.2} parent=11 // pred_fallthru
        _
      // Predicated region
      $region17: #{guidenn_forward.2} parent=11 // pred_check
        %p163 = pneg %p93
      $region18: #{guidenn_forward.2} parent=11 // pred_check_branch
        %165 = sbr.rel (%p163) target = $region20
      $region19: #{guidenn_forward.2} parent=11 // pred_region
        _
      $region20: #{guidenn_forward.2} parent=11 // pred_fallthru
        _
    $region12: #{guidenn_forward.2} parent=5 // pred_fallthru
      _
    %p166 = scmp.lt.s32.totalorder %s11, 2
    // Predicated region
    $region21: #{guidenn_forward.2} parent=5 // pred_check
      %p167 = pneg %p166
    $region22: #{guidenn_forward.2} parent=5 // pred_check_branch
      %169 = sbr.rel (%p167) target = $region24
    $region23: #{guidenn_forward.2} parent=5 // pred_region
      // Predicated region
      $region25: #{guidenn_forward.2} parent=23 // pred_check
        %p170 = pneg %p45
      $region26: #{guidenn_forward.2} parent=23 // pred_check_branch
        %172 = sbr.rel (%p170) target = $region28
      $region27: #{guidenn_forward.2} parent=23 // pred_region
        %s173 = smul.u32 2, %s19
        %p174 = scmp.lt.s32.totalorder %s18, 1
        %s175 = scalar_select %p174, %s18, 1
        %p176 = scmp.lt.s32.totalorder %s173, 1
        %s177 = scalar_select %p176, %s173, 1
        %s178 = smul.addr %s175, 2
        %s179 = sadd.s32 %s177, %s178
        %s180 = smul.addr %s179, 4
        %s181 = scalar_lea.vmem %s0, %s180
        %s182 = smul.u32 2, %s19
      $region28: #{guidenn_forward.2} parent=23 // pred_fallthru
        _
    $region24: #{guidenn_forward.2} parent=5 // pred_fallthru
      _
    %p183 = scmp.le.s32.totalorder 1, %s11
    %p184 = scmp.lt.s32.totalorder %s11, 3
    %p185 = pnand %p183, %p184
    %p186 = pneg %p185
    // Predicated region
    $region29: #{guidenn_forward.2} parent=5 // pred_check
      _
    $region30: #{guidenn_forward.2} parent=5 // pred_check_branch
      %188 = sbr.rel (%p185) target = $region32
    $region31: #{guidenn_forward.2} parent=5 // pred_region
      %s189 = ssub.s32 %s11, 1
      %s190 = smul.u32 2, %s21
      %p191 = scmp.lt.s32.totalorder %s20, 1
      %s192 = scalar_select %p191, %s20, 1
      %p193 = scmp.lt.s32.totalorder %s190, 1
      %s194 = scalar_select %p193, %s190, 1
      %s195 = smul.addr %s192, 2
      %s196 = sadd.s32 %s194, %s195
      %s197 = smul.addr %s196, 4
      %s198 = scalar_lea.vmem %s0, %s197
      %p199 = pneg %p51
      %p200 = pneg %p48
      %p201 = pneg %p72
      %p202 = pneg %p69
      %p203 = pneg %p93
      %p204 = pneg %p90
      %p205 = pneg %p119
      %p206 = pneg %p116
      %p207 = scmp.lt.s32.totalorder %s20, 1
      %s208 = scalar_select %p207, %s20, 1
      %s209 = smul.addr %s208, 2
      %s210 = smul.addr %s209, 8
      %s211 = scalar_lea.vmem %s3, %s210
      %p212 = pneg %p145
      %p213 = pneg %p142
      %p214 = scmp.lt.s32.totalorder %s20, 1
      %s215 = scalar_select %p214, %s20, 1
      %s216 = smul.addr %s215, 2
      %s217 = smul.addr %s216, 8
      %s218 = scalar_lea.vmem %s4, %s217
      %s219 = smul.u32 2, %s21
      %p220 = scmp.lt.s32.totalorder %s20, 1
      %s221 = scalar_select %p220, %s20, 1
      %p222 = scmp.lt.s32.totalorder %s219, 1
      %s223 = scalar_select %p222, %s219, 1
      %s224 = smul.addr %s221, 2
      %s225 = sadd.s32 %s223, %s224
      %s226 = smul.addr %s225, 4
      %s227 = scalar_lea.vmem %s0, %s226
      %s228 = smul.u32 2, %s21
      %p229 = scmp.lt.s32.totalorder %s20, 1
      %s230 = scalar_select %p229, %s20, 1
      %s231 = smul.addr %s230, 2
      %s232 = smul.addr %s231, 8
      %s233 = scalar_lea.vmem %s3, %s232
      %p234 = scmp.lt.s32.totalorder %s20, 1
      %s235 = scalar_select %p234, %s20, 1
      %s236 = smul.addr %s235, 2
      %s237 = smul.addr %s236, 8
      %s238 = scalar_lea.vmem %s4, %s237
      %p239 = scmp.eq.s32.totalorder %s21, 0
      // Predicated region
      $region33: #{guidenn_forward.2} parent=31 // pred_check
        %p240 = pneg %p239
      $region34: #{guidenn_forward.2} parent=31 // pred_check_branch
        %242 = sbr.rel (%p240) target = $region36
      $region35: #{guidenn_forward.2} parent=31 // pred_region
        %vm243 = vcmask 7168
        %244 = vst.msk [vmem:[%s233] sm:$0xff] %vm243, 0.0
        %245 = vst.msk [vmem:[%s233 + $0x8] sm:$0xff] %vm243, 0.0
        %246 = vst.msk [vmem:[%s238] sm:$0xff] %vm243, 0.0
        %247 = vst.msk [vmem:[%s238 + $0x8] sm:$0xff] %vm243, 0.0
      $region36: #{guidenn_forward.2} parent=31 // pred_fallthru
        _
      %v248 = vld [vmem:[%s227] sm:$0x77]
      %v249 = vld [vmem:[%s1] sm:$0xff]
      %v250 = vld [vmem:[%s1 + $0x8] sm:$0xff]
      %v251 = vld [vmem:[%s2] sm:$0xff]
      %v252 = vld [vmem:[%s2 + $0x8] sm:$0xff]
      %254 = vset.pattern.permute.xlu0 0
      %255 = vperm.xlu0 %254, %v249
      %v256 = vpop.permute.xlu0 %255
      %259 = vset.pattern.permute.xlu0 0
      %260 = vperm.xlu0 %259, %v250
      %v261 = vpop.permute.xlu0 %260
      %v264 = vlaneseq
      %v265 = vshrl.u32 %v264, 7
      %v266 = vsub.s32 0, %v265
      %v267 = vrot.slane %v248, %v266
      %v268 = vlaneseq
      %v269 = vshrl.u32 %v268, 7
      %v270 = vsub.s32 4, %v269
      %v271 = vrot.slane %v248, %v270
      %v274 = vlaneseq
      %v275 = vshrl.u32 %v274, 7
      %v276 = vsub.s32 0, %v275
      %v277 = vrot.slane %v267, %v276
      %v278 = vlaneseq
      %v279 = vshrl.u32 %v278, 7
      %v280 = vsub.s32 0, %v279
      %v281 = vrot.slane %v271, %v280
      %v282 = vmul.f32 %v256, %v277
      %v283 = vmul.f32 %v256, %v281
      %v284 = vmul.f32 %v261, %v277
      %v285 = vmul.f32 %v261, %v281
      %286 = vset.pattern.permute.xlu0 1
      %287 = vperm.xlu0 %286, %v249
      %v288 = vpop.permute.xlu0 %287
      %290 = vset.pattern.permute.xlu0 1
      %291 = vperm.xlu0 %290, %v250
      %v292 = vpop.permute.xlu0 %291
      %v294 = vlaneseq
      %v295 = vshrl.u32 %v294, 7
      %v296 = vsub.s32 1, %v295
      %v297 = vrot.slane %v248, %v296
      %v298 = vlaneseq
      %v299 = vshrl.u32 %v298, 7
      %v300 = vsub.s32 5, %v299
      %v301 = vrot.slane %v248, %v300
      %v304 = vlaneseq
      %v305 = vshrl.u32 %v304, 7
      %v306 = vsub.s32 1, %v305
      %v307 = vrot.slane %v297, %v306
      %v308 = vlaneseq
      %v309 = vshrl.u32 %v308, 7
      %v310 = vsub.s32 1, %v309
      %v311 = vrot.slane %v301, %v310
      %v312 = vmul.f32 %v288, %v307
      %v313 = vmul.f32 %v288, %v311
      %v314 = vmul.f32 %v292, %v307
      %v315 = vmul.f32 %v292, %v311
      %v316 = vadd.f32 %v282, %v312
      %v317 = vadd.f32 %v283, %v313
      %v318 = vadd.f32 %v284, %v314
      %v319 = vadd.f32 %v285, %v315
      %320 = vset.pattern.permute.xlu0 2
      %321 = vperm.xlu0 %320, %v249
      %v322 = vpop.permute.xlu0 %321
      %324 = vset.pattern.permute.xlu0 2
      %325 = vperm.xlu0 %324, %v250
      %v326 = vpop.permute.xlu0 %325
      %v328 = vlaneseq
      %v329 = vshrl.u32 %v328, 7
      %v330 = vsub.s32 2, %v329
      %v331 = vrot.slane %v248, %v330
      %v332 = vlaneseq
      %v333 = vshrl.u32 %v332, 7
      %v334 = vsub.s32 6, %v333
      %v335 = vrot.slane %v248, %v334
      %v338 = vlaneseq
      %v339 = vshrl.u32 %v338, 7
      %v340 = vsub.s32 2, %v339
      %v341 = vrot.slane %v331, %v340
      %v342 = vlaneseq
      %v343 = vshrl.u32 %v342, 7
      %v344 = vsub.s32 2, %v343
      %v345 = vrot.slane %v335, %v344
      %v346 = vmul.f32 %v322, %v341
      %v347 = vmul.f32 %v322, %v345
      %v348 = vmul.f32 %v326, %v341
      %v349 = vmul.f32 %v326, %v345
      %v350 = vadd.f32 %v316, %v346
      %v351 = vadd.f32 %v317, %v347
      %v352 = vadd.f32 %v318, %v348
      %v353 = vadd.f32 %v319, %v349
      %355 = vset.pattern.permute.xlu0 0
      %356 = vperm.xlu0 %355, %v251
      %v357 = vpop.permute.xlu0 %356
      %360 = vset.pattern.permute.xlu0 0
      %361 = vperm.xlu0 %360, %v252
      %v362 = vpop.permute.xlu0 %361
      %v364 = vadd.f32 %v350, %v357
      %v365 = vadd.f32 %v351, %v357
      %v366 = vadd.f32 %v352, %v362
      %v367 = vadd.f32 %v353, %v362
      %v368 = vld [vmem:[%s233] sm:$0xff]
      %v369 = vld [vmem:[%s233 + $0x8] sm:$0xff]
      %v370 = vadd.f32 %v364, %v365
      %371 = vadd.xlane.f32.xlu0 %v370
      %v372 = vpop.xlane.xlu0 %371
      %v373 = vadd.f32 %v366, %v367
      %374 = vadd.xlane.f32.xlu0 %v373
      %v375 = vpop.xlane.xlu0 %374
      %v376 = vadd.f32 %v368, %v372
      %v377 = vadd.f32 %v369, %v375
      %vm378 = vcmask 7168
      %379 = vst.msk [vmem:[%s233] sm:$0xff] %vm378, %v376
      %380 = vst.msk [vmem:[%s233 + $0x8] sm:$0xff] %vm378, %v377
      %v381 = vld [vmem:[%s238] sm:$0xff]
      %v382 = vld [vmem:[%s238 + $0x8] sm:$0xff]
      %v383 = vmul.f32 %v364, %v364
      %v384 = vmul.f32 %v365, %v365
      %v385 = vmul.f32 %v366, %v366
      %v386 = vmul.f32 %v367, %v367
      %v387 = vadd.f32 %v383, %v384
      %388 = vadd.xlane.f32.xlu0 %v387
      %v389 = vpop.xlane.xlu0 %388
      %v390 = vadd.f32 %v385, %v386
      %391 = vadd.xlane.f32.xlu0 %v390
      %v392 = vpop.xlane.xlu0 %391
      %v393 = vadd.f32 %v381, %v389
      %v394 = vadd.f32 %v382, %v392
      %395 = vst.msk [vmem:[%s238] sm:$0xff] %vm378, %v393
      %396 = vst.msk [vmem:[%s238 + $0x8] sm:$0xff] %vm378, %v394
      %p397 = scmp.lt.s32.totalorder %s20, 1
      %s398 = scalar_select %p397, %s20, 1
      %s399 = smul.addr %s398, 2
      %s400 = smul.addr %s399, 8
      %s401 = scalar_lea.vmem %s3, %s400
      %p402 = scmp.lt.s32.totalorder %s20, 1
      %s403 = scalar_select %p402, %s20, 1
      %s404 = smul.addr %s403, 2
      %s405 = smul.addr %s404, 8
      %s406 = scalar_lea.vmem %s4, %s405
      // Predicated region
      $region37: #{guidenn_forward.2} parent=31 // pred_check
        %p407 = pneg %p116
      $region38: #{guidenn_forward.2} parent=31 // pred_check_branch
        %409 = sbr.rel (%p407) target = $region40
      $region39: #{guidenn_forward.2} parent=31 // pred_region
        _
      $region40: #{guidenn_forward.2} parent=31 // pred_fallthru
        _
      // Predicated region
      $region41: #{guidenn_forward.2} parent=31 // pred_check
        %p410 = pneg %p142
      $region42: #{guidenn_forward.2} parent=31 // pred_check_branch
        %412 = sbr.rel (%p410) target = $region44
      $region43: #{guidenn_forward.2} parent=31 // pred_region
        _
      $region44: #{guidenn_forward.2} parent=31 // pred_fallthru
        _
    $region32: #{guidenn_forward.2} parent=5 // pred_fallthru
      _
    %p413 = scmp.le.s32.totalorder 2, %s11
    // Predicated region
    $region45: #{guidenn_forward.2} parent=5 // pred_check
      %p414 = pneg %p413
    $region46: #{guidenn_forward.2} parent=5 // pred_check_branch
      %416 = sbr.rel (%p414) target = $region48
    $region47: #{guidenn_forward.2} parent=5 // pred_region
      %s417 = ssub.s32 %s11, 2
      // Predicated region
      $region49: #{guidenn_forward.2} parent=47 // pred_check
        %p418 = pneg %p122
      $region50: #{guidenn_forward.2} parent=47 // pred_check_branch
        %420 = sbr.rel (%p418) target = $region52
      $region51: #{guidenn_forward.2} parent=47 // pred_region
        %p421 = scmp.lt.s32.totalorder %s22, 1
        %s422 = scalar_select %p421, %s22, 1
        %s423 = smul.addr %s422, 2
        %s424 = smul.addr %s423, 8
        %s425 = scalar_lea.vmem %s3, %s424
      $region52: #{guidenn_forward.2} parent=47 // pred_fallthru
        _
      // Predicated region
      $region53: #{guidenn_forward.2} parent=47 // pred_check
        %p426 = pneg %p148
      $region54: #{guidenn_forward.2} parent=47 // pred_check_branch
        %428 = sbr.rel (%p426) target = $region56
      $region55: #{guidenn_forward.2} parent=47 // pred_region
        %p429 = scmp.lt.s32.totalorder %s22, 1
        %s430 = scalar_select %p429, %s22, 1
        %s431 = smul.addr %s430, 2
        %s432 = smul.addr %s431, 8
        %s433 = scalar_lea.vmem %s4, %s432
      $region56: #{guidenn_forward.2} parent=47 // pred_fallthru
        _
    $region48: #{guidenn_forward.2} parent=5 // pred_fallthru
      _
  $region6: #{guidenn_forward.2} parent=0 // loop_footer
    %s15 = sadd.s32 1, %s11
  $region7: #{guidenn_forward.2} parent=0 // loop_footer_branch
    %10 = sbr.rel target = $region3
  $region8: #{guidenn_forward.2} parent=0 // loop_exit
    _

// kernel: guidenn_forward.3
$region0: #{guidenn_forward.3}
  #allocation0 [shape = 'u32[]', space=smem, size = 0x4, offset = 0x4, fixed_abs, tag = 'smem constant byte address 0x4 - core index']
  #allocation1 [shape = 'u32[144,128]{1,0:T(1,128)}', space=vmem, size = 0x12000, scoped, tag = 'internal scratch']
  #allocation2 [shape = 'f32[1,1]{1,0:T(1,128)S(1)}', space=vmem, size = 0x200, scoped, tag = 'scoped memory for guidenn_forward.3']
  %s0 = inlined_call_operand.vmem [shape: f32[2,3,256], index: 0, kind: input, shape index: {}]
  %s1 = inlined_call_operand.vmem [shape: f32[16,3], index: 1, kind: input, shape index: {}]
  %s2 = inlined_call_operand.vmem [shape: f32[16,1], index: 2, kind: input, shape index: {}]
  %s3 = inlined_call_operand.vmem [shape: f32[16,1], index: 3, kind: input, shape index: {}]
  %s4 = inlined_call_operand.<no memory space> [shape: f32[1,1], index: 4, kind: input, shape index: {}]
  %s5 = inlined_call_operand.vmem [shape: f32[2,1,256], index: 5, kind: output, shape index: {}]
  %s6 = sld [smem:[#allocation0]]
  $region53: #{guidenn_forward.3} parent=0
    _
  %s8 = ssub.s32 1, %s6
  %s9 = scalar_select 0, %s8, %s6
  %v10 = vstv %s4
  %11 = vst [vmem:[#allocation2] sm:$0x1] %v10
  loop: start=0, step=1, limit=4
  $region2: #{guidenn_forward.3} parent=0 // loop_pre_header
    _
  $region3: #{guidenn_forward.3} parent=0 // loop_header
    %s13 = sphi 0, %s17
    %p14 = scmp.ge.s32.totalorder %s13, 4
    %s20 = sphi 0, %s32
    %s21 = sphi 0, %s28
    %s22 = sphi 0, %s20
    %s23 = sphi 0, %s21
    %s24 = sphi 0, %s22
    %s25 = sphi 0, %s23
    %s37 = sphi 0, %s39
    %s40 = sphi 0, %s37
    %s41 = sphi 0, %s40
    %s57 = sphi 0, %s41
    %s61 = sphi 0, %s61
    %s63 = sphi 0, %s61
    %s64 = sphi 0, %s63
    %s78 = sphi 0, %s64
    %s82 = sphi 0, %s82
    %s84 = sphi 0, %s82
    %s85 = sphi 0, %s84
    %s99 = sphi 0, %s85
    %s103 = sphi 0, %s103
    %s105 = sphi 0, %s103
    %s106 = sphi 0, %s105
    %s120 = sphi 0, %s106
    %s124 = sphi 0, %s124
    %s126 = sphi 0, %s124
    %s127 = sphi 0, %s126
    %s141 = sphi 0, %s127
    %s149 = sphi 0, %s151
    %s152 = sphi 0, %s149
    %s153 = sphi 0, %s152
    %s169 = sphi 0, %s153
  $region4: #{guidenn_forward.3} parent=0 // loop_header_branch
    %16 = sbr.rel (%p14) target = $region8
  $region5: #{guidenn_forward.3} parent=0 // loop_body
    %s18 = ssub.s32 %s13, 1
    %s19 = ssub.s32 %s13, 2
    %s26 = sadd.s32 1, %s21
    %p27 = scmp.ge.s32.totalorder %s26, 1
    %s28 = scalar_select %p27, 0, %s26
    %s29 = sadd.s32 1, %s20
    %s30 = scalar_select %p27, %s29, %s20
    %p31 = scmp.ge.s32.totalorder %s30, 2
    %s32 = scalar_select %p31, 0, %s30
    %s33 = ssub.s32 %s20, %s32
    %s34 = ssub.s32 %s21, %s28
    %s35 = sor.u32 %s33, %s34
    %p36 = scmp.eq.s32.totalorder %s35, 0
    %s38 = sadd.s32 %s37, 1
    %s39 = scalar_select %p36, %s37, %s38
    %p42 = pneg %p36
    %p43 = scmp.eq.s32.totalorder %s13, 1
    %p44 = por %p42, %p43
    %p45 = scmp.ne.s32.totalorder %s37, %s40
    %p46 = scmp.eq.s32.totalorder %s13, 0
    %p47 = por %p45, %p46
    %p48 = scmp.ne.s32.totalorder %s37, %s40
    %p49 = scmp.eq.s32.totalorder %s18, 1
    %p50 = por %p48, %p49
    %p51 = scmp.ne.s32.totalorder %s40, %s41
    %p52 = scmp.eq.s32.totalorder %s18, 0
    %p53 = por %p51, %p52
    %p54 = scmp.ne.s32.totalorder %s40, %s41
    %p55 = scmp.eq.s32.totalorder %s19, 1
    %p56 = por %p54, %p55
    %p58 = scmp.ne.s32.totalorder %s41, %s57
    %p59 = scmp.eq.s32.totalorder %s19, 0
    %p60 = por %p58, %p59
    %s62 = sadd.s32 %s61, 1
    %p65 = scmp.eq.s32.totalorder %s13, 1
    %p66 = scmp.ne.s32.totalorder %s61, %s63
    %p67 = scmp.eq.s32.totalorder %s13, 0
    %p68 = por %p66, %p67
    %p69 = scmp.ne.s32.totalorder %s61, %s63
    %p70 = scmp.eq.s32.totalorder %s18, 1
    %p71 = por %p69, %p70
    %p72 = scmp.ne.s32.totalorder %s63, %s64
    %p73 = scmp.eq.s32.totalorder %s18, 0
    %p74 = por %p72, %p73
    %p75 = scmp.ne.s32.totalorder %s63, %s64
    %p76 = scmp.eq.s32.totalorder %s19, 1
    %p77 = por %p75, %p76
    %p79 = scmp.ne.s32.totalorder %s64, %s78
    %p80 = scmp.eq.s32.totalorder %s19, 0
    %p81 = por %p79, %p80
    %s83 = sadd.s32 %s82, 1
    %p86 = scmp.eq.s32.totalorder %s13, 1
    %p87 = scmp.ne.s32.totalorder %s82, %s84
    %p88 = scmp.eq.s32.totalorder %s13, 0
    %p89 = por %p87, %p88
    %p90 = scmp.ne.s32.totalorder %s82, %s84
    %p91 = scmp.eq.s32.totalorder %s18, 1
    %p92 = por %p90, %p91
    %p93 = scmp.ne.s32.totalorder %s84, %s85
    %p94 = scmp.eq.s32.totalorder %s18, 0
    %p95 = por %p93, %p94
    %p96 = scmp.ne.s32.totalorder %s84, %s85
    %p97 = scmp.eq.s32.totalorder %s19, 1
    %p98 = por %p96, %p97
    %p100 = scmp.ne.s32.totalorder %s85, %s99
    %p101 = scmp.eq.s32.totalorder %s19, 0
    %p102 = por %p100, %p101
    %s104 = sadd.s32 %s103, 1
    %p107 = scmp.eq.s32.totalorder %s13, 1
    %p108 = scmp.ne.s32.totalorder %s103, %s105
    %p109 = scmp.eq.s32.totalorder %s13, 0
    %p110 = por %p108, %p109
    %p111 = scmp.ne.s32.totalorder %s103, %s105
    %p112 = scmp.eq.s32.totalorder %s18, 1
    %p113 = por %p111, %p112
    %p114 = scmp.ne.s32.totalorder %s105, %s106
    %p115 = scmp.eq.s32.totalorder %s18, 0
    %p116 = por %p114, %p115
    %p117 = scmp.ne.s32.totalorder %s105, %s106
    %p118 = scmp.eq.s32.totalorder %s19, 1
    %p119 = por %p117, %p118
    %p121 = scmp.ne.s32.totalorder %s106, %s120
    %p122 = scmp.eq.s32.totalorder %s19, 0
    %p123 = por %p121, %p122
    %s125 = sadd.s32 %s124, 1
    %p128 = scmp.eq.s32.totalorder %s13, 1
    %p129 = scmp.ne.s32.totalorder %s124, %s126
    %p130 = scmp.eq.s32.totalorder %s13, 0
    %p131 = por %p129, %p130
    %p132 = scmp.ne.s32.totalorder %s124, %s126
    %p133 = scmp.eq.s32.totalorder %s18, 1
    %p134 = por %p132, %p133
    %p135 = scmp.ne.s32.totalorder %s126, %s127
    %p136 = scmp.eq.s32.totalorder %s18, 0
    %p137 = por %p135, %p136
    %p138 = scmp.ne.s32.totalorder %s126, %s127
    %p139 = scmp.eq.s32.totalorder %s19, 1
    %p140 = por %p138, %p139
    %p142 = scmp.ne.s32.totalorder %s127, %s141
    %p143 = scmp.eq.s32.totalorder %s19, 0
    %p144 = por %p142, %p143
    %s145 = ssub.s32 %s20, %s32
    %s146 = ssub.s32 %s21, %s28
    %s147 = sor.u32 %s145, %s146
    %p148 = scmp.eq.s32.totalorder %s147, 0
    %s150 = sadd.s32 %s149, 1
    %s151 = scalar_select %p148, %s149, %s150
    %p154 = pneg %p148
    %p155 = scmp.eq.s32.totalorder %s13, 1
    %p156 = por %p154, %p155
    %p157 = scmp.ne.s32.totalorder %s149, %s152
    %p158 = scmp.eq.s32.totalorder %s13, 0
    %p159 = por %p157, %p158
    %p160 = scmp.ne.s32.totalorder %s149, %s152
    %p161 = scmp.eq.s32.totalorder %s18, 1
    %p162 = por %p160, %p161
    %p163 = scmp.ne.s32.totalorder %s152, %s153
    %p164 = scmp.eq.s32.totalorder %s18, 0
    %p165 = por %p163, %p164
    %p166 = scmp.ne.s32.totalorder %s152, %s153
    %p167 = scmp.eq.s32.totalorder %s19, 1
    %p168 = por %p166, %p167
    %p170 = scmp.ne.s32.totalorder %s153, %s169
    %p171 = scmp.eq.s32.totalorder %s19, 0
    %p172 = por %p170, %p171
    %p173 = scmp.le.s32.totalorder 1, %s13
    %p174 = scmp.lt.s32.totalorder %s13, 3
    %p175 = pnand %p173, %p174
    %p176 = pneg %p175
    // Predicated region
    $region9: #{guidenn_forward.3} parent=5 // pred_check
      _
    $region10: #{guidenn_forward.3} parent=5 // pred_check_branch
      %178 = sbr.rel (%p175) target = $region12
    $region11: #{guidenn_forward.3} parent=5 // pred_region
      %s179 = ssub.s32 %s13, 1
      // Predicated region
      $region13: #{guidenn_forward.3} parent=11 // pred_check
        %p180 = pneg %p74
      $region14: #{guidenn_forward.3} parent=11 // pred_check_branch
        %182 = sbr.rel (%p180) target = $region16
      $region15: #{guidenn_forward.3} parent=11 // pred_region
        _
      $region16: #{guidenn_forward.3} parent=11 // pred_fallthru
        _
      // Predicated region
      $region17: #{guidenn_forward.3} parent=11 // pred_check
        %p183 = pneg %p95
      $region18: #{guidenn_forward.3} parent=11 // pred_check_branch
        %185 = sbr.rel (%p183) target = $region20
      $region19: #{guidenn_forward.3} parent=11 // pred_region
        _
      $region20: #{guidenn_forward.3} parent=11 // pred_fallthru
        _
      // Predicated region
      $region21: #{guidenn_forward.3} parent=11 // pred_check
        %p186 = pneg %p116
      $region22: #{guidenn_forward.3} parent=11 // pred_check_branch
        %188 = sbr.rel (%p186) target = $region24
      $region23: #{guidenn_forward.3} parent=11 // pred_region
        _
      $region24: #{guidenn_forward.3} parent=11 // pred_fallthru
        _
      // Predicated region
      $region25: #{guidenn_forward.3} parent=11 // pred_check
        %p189 = pneg %p137
      $region26: #{guidenn_forward.3} parent=11 // pred_check_branch
        %191 = sbr.rel (%p189) target = $region28
      $region27: #{guidenn_forward.3} parent=11 // pred_region
        _
      $region28: #{guidenn_forward.3} parent=11 // pred_fallthru
        _
    $region12: #{guidenn_forward.3} parent=5 // pred_fallthru
      _
    %p192 = scmp.lt.s32.totalorder %s13, 2
    // Predicated region
    $region29: #{guidenn_forward.3} parent=5 // pred_check
      %p193 = pneg %p192
    $region30: #{guidenn_forward.3} parent=5 // pred_check_branch
      %195 = sbr.rel (%p193) target = $region32
    $region31: #{guidenn_forward.3} parent=5 // pred_region
      // Predicated region
      $region33: #{guidenn_forward.3} parent=31 // pred_check
        %p196 = pneg %p47
      $region34: #{guidenn_forward.3} parent=31 // pred_check_branch
        %198 = sbr.rel (%p196) target = $region36
      $region35: #{guidenn_forward.3} parent=31 // pred_region
        %s199 = smul.u32 2, %s21
        %p200 = scmp.lt.s32.totalorder %s20, 1
        %s201 = scalar_select %p200, %s20, 1
        %p202 = scmp.lt.s32.totalorder %s199, 1
        %s203 = scalar_select %p202, %s199, 1
        %s204 = smul.addr %s201, 2
        %s205 = sadd.s32 %s203, %s204
        %s206 = smul.addr %s205, 4
        %s207 = scalar_lea.vmem %s0, %s206
        %s208 = smul.u32 2, %s21
      $region36: #{guidenn_forward.3} parent=31 // pred_fallthru
        _
    $region32: #{guidenn_forward.3} parent=5 // pred_fallthru
      _
    %p209 = scmp.le.s32.totalorder 1, %s13
    %p210 = scmp.lt.s32.totalorder %s13, 3
    %p211 = pnand %p209, %p210
    %p212 = pneg %p211
    // Predicated region
    $region37: #{guidenn_forward.3} parent=5 // pred_check
      _
    $region38: #{guidenn_forward.3} parent=5 // pred_check_branch
      %214 = sbr.rel (%p211) target = $region40
    $region39: #{guidenn_forward.3} parent=5 // pred_region
      %s215 = ssub.s32 %s13, 1
      %s216 = smul.u32 2, %s23
      %p217 = scmp.lt.s32.totalorder %s22, 1
      %s218 = scalar_select %p217, %s22, 1
      %p219 = scmp.lt.s32.totalorder %s216, 1
      %s220 = scalar_select %p219, %s216, 1
      %s221 = smul.addr %s218, 2
      %s222 = sadd.s32 %s220, %s221
      %s223 = smul.addr %s222, 4
      %s224 = scalar_lea.vmem %s0, %s223
      %p225 = pneg %p53
      %p226 = pneg %p50
      %p227 = pneg %p74
      %p228 = pneg %p71
      %p229 = pneg %p95
      %p230 = pneg %p92
      %p231 = pneg %p116
      %p232 = pneg %p113
      %p233 = pneg %p137
      %p234 = pneg %p134
      %p235 = pneg %p165
      %p236 = pneg %p162
      %s237 = smul.u32 2, %s23
      %p238 = scmp.lt.s32.totalorder %s22, 1
      %s239 = scalar_select %p238, %s22, 1
      %p240 = scmp.lt.s32.totalorder %s237, 1
      %s241 = scalar_select %p240, %s237, 1
      %s242 = smul.addr %s239, 2
      %s243 = sadd.s32 %s241, %s242
      %s244 = scalar_lea.vmem %s5, %s243
      %s245 = smul.u32 2, %s23
      %p246 = scmp.lt.s32.totalorder %s22, 1
      %s247 = scalar_select %p246, %s22, 1
      %p248 = scmp.lt.s32.totalorder %s245, 1
      %s249 = scalar_select %p248, %s245, 1
      %s250 = smul.addr %s247, 2
      %s251 = sadd.s32 %s249, %s250
      %s252 = smul.addr %s251, 4
      %s253 = scalar_lea.vmem %s0, %s252
      %s254 = smul.u32 2, %s23
      %s255 = smul.u32 2, %s23
      %p256 = scmp.lt.s32.totalorder %s22, 1
      %s257 = scalar_select %p256, %s22, 1
      %p258 = scmp.lt.s32.totalorder %s255, 1
      %s259 = scalar_select %p258, %s255, 1
      %s260 = smul.addr %s257, 2
      %s261 = sadd.s32 %s259, %s260
      %s262 = scalar_lea.vmem %s5, %s261
      %s263 = smul.u32 2, %s23
      %v264 = vld [vmem:[%s253] sm:$0x77]
      %v265 = vld [vmem:[%s1] sm:$0xff]
      %v266 = vld [vmem:[%s1 + $0x8] sm:$0xff]
      %v267 = vld [vmem:[%s2] sm:$0xff]
      %v268 = vld [vmem:[%s2 + $0x8] sm:$0xff]
      %270 = vset.pattern.permute.xlu0 0
      %271 = vperm.xlu0 %270, %v265
      %v272 = vpop.permute.xlu0 %271
      %275 = vset.pattern.permute.xlu0 0
      %276 = vperm.xlu0 %275, %v266
      %v277 = vpop.permute.xlu0 %276
      %v280 = vlaneseq
      %v281 = vshrl.u32 %v280, 7
      %v282 = vsub.s32 0, %v281
      %v283 = vrot.slane %v264, %v282
      %v284 = vlaneseq
      %v285 = vshrl.u32 %v284, 7
      %v286 = vsub.s32 4, %v285
      %v287 = vrot.slane %v264, %v286
      %v290 = vlaneseq
      %v291 = vshrl.u32 %v290, 7
      %v292 = vsub.s32 0, %v291
      %v293 = vrot.slane %v283, %v292
      %v294 = vlaneseq
      %v295 = vshrl.u32 %v294, 7
      %v296 = vsub.s32 0, %v295
      %v297 = vrot.slane %v287, %v296
      %v298 = vmul.f32 %v272, %v293
      %v299 = vmul.f32 %v272, %v297
      %v300 = vmul.f32 %v277, %v293
      %v301 = vmul.f32 %v277, %v297
      %302 = vset.pattern.permute.xlu0 1
      %303 = vperm.xlu0 %302, %v265
      %v304 = vpop.permute.xlu0 %303
      %306 = vset.pattern.permute.xlu0 1
      %307 = vperm.xlu0 %306, %v266
      %v308 = vpop.permute.xlu0 %307
      %v310 = vlaneseq
      %v311 = vshrl.u32 %v310, 7
      %v312 = vsub.s32 1, %v311
      %v313 = vrot.slane %v264, %v312
      %v314 = vlaneseq
      %v315 = vshrl.u32 %v314, 7
      %v316 = vsub.s32 5, %v315
      %v317 = vrot.slane %v264, %v316
      %v320 = vlaneseq
      %v321 = vshrl.u32 %v320, 7
      %v322 = vsub.s32 1, %v321
      %v323 = vrot.slane %v313, %v322
      %v324 = vlaneseq
      %v325 = vshrl.u32 %v324, 7
      %v326 = vsub.s32 1, %v325
      %v327 = vrot.slane %v317, %v326
      %v328 = vmul.f32 %v304, %v323
      %v329 = vmul.f32 %v304, %v327
      %v330 = vmul.f32 %v308, %v323
      %v331 = vmul.f32 %v308, %v327
      %v332 = vadd.f32 %v298, %v328
      %v333 = vadd.f32 %v299, %v329
      %v334 = vadd.f32 %v300, %v330
      %v335 = vadd.f32 %v301, %v331
      %336 = vset.pattern.permute.xlu0 2
      %337 = vperm.xlu0 %336, %v265
      %v338 = vpop.permute.xlu0 %337
      %340 = vset.pattern.permute.xlu0 2
      %341 = vperm.xlu0 %340, %v266
      %v342 = vpop.permute.xlu0 %341
      %v344 = vlaneseq
      %v345 = vshrl.u32 %v344, 7
      %v346 = vsub.s32 2, %v345
      %v347 = vrot.slane %v264, %v346
      %v348 = vlaneseq
      %v349 = vshrl.u32 %v348, 7
      %v350 = vsub.s32 6, %v349
      %v351 = vrot.slane %v264, %v350
      %v354 = vlaneseq
      %v355 = vshrl.u32 %v354, 7
      %v356 = vsub.s32 2, %v355
      %v357 = vrot.slane %v347, %v356
      %v358 = vlaneseq
      %v359 = vshrl.u32 %v358, 7
      %v360 = vsub.s32 2, %v359
      %v361 = vrot.slane %v351, %v360
      %v362 = vmul.f32 %v338, %v357
      %v363 = vmul.f32 %v338, %v361
      %v364 = vmul.f32 %v342, %v357
      %v365 = vmul.f32 %v342, %v361
      %v366 = vadd.f32 %v332, %v362
      %v367 = vadd.f32 %v333, %v363
      %v368 = vadd.f32 %v334, %v364
      %v369 = vadd.f32 %v335, %v365
      %371 = vset.pattern.permute.xlu0 0
      %372 = vperm.xlu0 %371, %v267
      %v373 = vpop.permute.xlu0 %372
      %376 = vset.pattern.permute.xlu0 0
      %377 = vperm.xlu0 %376, %v268
      %v378 = vpop.permute.xlu0 %377
      %v380 = vadd.f32 %v366, %v373
      %v381 = vadd.f32 %v367, %v373
      %v382 = vadd.f32 %v368, %v378
      %v383 = vadd.f32 %v369, %v378
      %v384 = vmax.f32 %v380, 0.0
      %v385 = vmax.f32 %v381, 0.0
      %v386 = vmax.f32 %v382, 0.0
      %v387 = vmax.f32 %v383, 0.0
      %v388 = vld [vmem:[%s3] sm:$0xff]
      %v389 = vld [vmem:[%s3 + $0x8] sm:$0xff]
      %391 = vset.pattern.permute.xlu0 0
      %392 = vperm.xlu0 %391, %v388
      %v393 = vpop.permute.xlu0 %392
      %396 = vset.pattern.permute.xlu0 0
      %397 = vperm.xlu0 %396, %v389
      %v398 = vpop.permute.xlu0 %397
      %v400 = vmul.f32 %v393, %v384
      %v401 = vmul.f32 %v393, %v385
      %v402 = vmul.f32 %v398, %v386
      %v403 = vmul.f32 %v398, %v387
      %v404 = vadd.f32 %v400, %v402
      %v405 = vrot.slane %v404, 4
      %v406 = vadd.f32 %v404, %v405
      %v407 = vrot.slane %v406, 2
      %v408 = vadd.f32 %v406, %v407
      %v409 = vrot.slane %v408, 1
      %v410 = vadd.f32 %v408, %v409
      %v411 = vadd.f32 %v401, %v403
      %v412 = vrot.slane %v411, 4
      %v413 = vadd.f32 %v411, %v412
      %v414 = vrot.slane %v413, 2
      %v415 = vadd.f32 %v413, %v414
      %v416 = vrot.slane %v415, 1
      %v417 = vadd.f32 %v415, %v416
      %v418 = vld [vmem:[#allocation2] sm:$0x1]
      %420 = vset.pattern.permute.xlu0 0
      %421 = vperm.xlu0 %420, %v418
      %v422 = vpop.permute.xlu0 %421
      %v424 = vlaneseq
      %v425 = vshrl.u32 %v424, 7
      %v426 = vsub.s32 0, %v425
      %v427 = vrot.slane %v422, %v426
      %v428 = vadd.f32 %v410, %v427
      %v429 = vadd.f32 %v417, %v427
      %v430 = vtanh.pop %v428
      %v431 = vtanh.pop %v429
      %v434 = vcombine.low %v430, %v431
      %v436 = vunpack.c.l.s4 1966171168
      %v437 = vunpack.c.0.s8 %v436
      %v438 = vlaneseq
      %v439 = vshrl.u32 %v438, 7
      %v440 = vsub.s32 %v437, %v439
      %v441 = vrot.slane %v434, %v440
      %v443 = vunpack.c.l.s4 1966171168
      %v444 = vunpack.c.0.s8 %v443
      %v445 = vlaneseq
      %v446 = vshrl.u32 %v445, 7
      %v447 = vsub.s32 %v444, %v446
      %v448 = vrot.slane %v441, %v447
      %v450 = vlaneseq
      %vm451 = vcmp.ge.s32.totalorder %v450, 0
      %vm452 = vcmp.lt.s32.totalorder %v450, 256
      %vm453 = vmand %vm451, %vm452
      %454 = vst.msk [vmem:[%s262] sm:$0x3] %vm453, %v448
      %s455 = smul.u32 2, %s23
      %p456 = scmp.lt.s32.totalorder %s22, 1
      %s457 = scalar_select %p456, %s22, 1
      %p458 = scmp.lt.s32.totalorder %s455, 1
      %s459 = scalar_select %p458, %s455, 1
      %s460 = smul.addr %s457, 2
      %s461 = sadd.s32 %s459, %s460
      %s462 = scalar_lea.vmem %s5, %s461
      // Predicated region
      $region41: #{guidenn_forward.3} parent=39 // pred_check
        %p463 = pneg %p162
      $region42: #{guidenn_forward.3} parent=39 // pred_check_branch
        %465 = sbr.rel (%p463) target = $region44
      $region43: #{guidenn_forward.3} parent=39 // pred_region
        %s466 = smul.u32 2, %s23
      $region44: #{guidenn_forward.3} parent=39 // pred_fallthru
        _
    $region40: #{guidenn_forward.3} parent=5 // pred_fallthru
      _
    %p467 = scmp.le.s32.totalorder 2, %s13
    // Predicated region
    $region45: #{guidenn_forward.3} parent=5 // pred_check
      %p468 = pneg %p467
    $region46: #{guidenn_forward.3} parent=5 // pred_check_branch
      %470 = sbr.rel (%p468) target = $region48
    $region47: #{guidenn_forward.3} parent=5 // pred_region
      %s471 = ssub.s32 %s13, 2
      // Predicated region
      $region49: #{guidenn_forward.3} parent=47 // pred_check
        %p472 = pneg %p168
      $region50: #{guidenn_forward.3} parent=47 // pred_check_branch
        %474 = sbr.rel (%p472) target = $region52
      $region51: #{guidenn_forward.3} parent=47 // pred_region
        %s475 = smul.u32 2, %s25
        %p476 = scmp.lt.s32.totalorder %s24, 1
        %s477 = scalar_select %p476, %s24, 1
        %p478 = scmp.lt.s32.totalorder %s475, 1
        %s479 = scalar_select %p478, %s475, 1
        %s480 = smul.addr %s477, 2
        %s481 = sadd.s32 %s479, %s480
        %s482 = scalar_lea.vmem %s5, %s481
      $region52: #{guidenn_forward.3} parent=47 // pred_fallthru
        _
    $region48: #{guidenn_forward.3} parent=5 // pred_fallthru
      _
  $region6: #{guidenn_forward.3} parent=0 // loop_footer
    %s17 = sadd.s32 1, %s13
  $region7: #{guidenn_forward.3} parent=0 // loop_footer_branch
    %12 = sbr.rel target = $region3
  $region8: #{guidenn_forward.3} parent=0 // loop_exit
    _

</llo_original>
